<compile_context>
chip_gen: v7x
topology: tpu7x:2x2x1
jax: 0.10.0
libtpu: 0.0.40
codegen_flags: <defaults>
</compile_context>

<pallas_src>
import functools

import jax
import jax.numpy as jnp
from jax.experimental import pallas as pl
from jax.experimental.pallas import tpu as pltpu

RMS_EPS = 1e-6  # TODO(synk): eps of the repo's custom RMSNorm assumed to be 1e-6; verify.


def _mlp_gate_kernel(inv_tau_ref,
                     x1_ref, x2_ref,
                     w_ref, bg_ref,
                     wc_ref, bc_ref,
                     y_ref, *, approx_gelu):
    """Whole MLP_Gate forward, fully VMEM-resident (shapes are small)."""
    B, N, D = x1_ref.shape

    def branch(x_ref, br):
        # (B, N, D) -> (B*N, D): one 2-D MXU matmul per branch.  Relayout-free
        # because N % 8 == 0 (f32 sublane) and D % 128 == 0 (lane), asserted
        # in the wrapper.
        x = x_ref[...].reshape(B * N, D)
        h = jnp.dot(x.astype(w_ref.dtype), w_ref[br],          # bf16 x bf16
                    preferred_element_type=jnp.float32)        # f32 accumulate
        h = h + bg_ref[2 * br][None, :]                        # Linear bias (1, D)
        # RMSNorm over the feature axis (f32).
        ms = jnp.mean(h * h, axis=-1, keepdims=True)
        h = h * jax.lax.rsqrt(ms + RMS_EPS) * bg_ref[2 * br + 1][None, :]
        # tanh-GELU routes the transcendental to the EUP; approximate=False
        # reproduces torch.nn.GELU()'s exact-erf definition if needed.
        h = jax.nn.gelu(h, approximate=approx_gelu)
        # Mean over the sequence axis.
        return jnp.mean(h.reshape(B, N, D), axis=1)            # (B, D)

    x = branch(x1_ref, 0) + branch(x2_ref, 1)

    logits = jnp.dot(x.astype(wc_ref.dtype), wc_ref[...],
                     preferred_element_type=jnp.float32)
    logits = logits + bc_ref[...]                              # (B, bnum)

    # DiffSoftmax, hard=False: ret == y_soft == softmax(logits / tau).
    # Exact division for the (B, 1) denominator: free at this size and keeps
    # rows summing to 1 (the approx reciprocal broke the row-sum check).
    z = logits * inv_tau_ref[0, 0]                             # multiply, not divide
    z = z - jnp.max(z, axis=-1, keepdims=True)
    e = jnp.exp(z)
    y_ref[...] = (e / jnp.sum(e, axis=-1, keepdims=True)).astype(y_ref.dtype)


def prepare_params(params, weight_dtype=jnp.bfloat16):
    """One-time (hoisted) cast + pack of the parameters for the kernel.

    Do this once per parameter update, NOT per forward call: the f32->bf16
    cast and the stacking are ordinary XLA ops with their own HBM traffic.
    """
    w12 = jnp.stack([params['w1'], params['w2']], axis=0).astype(weight_dtype)  # (2, D, D)
    bg = jnp.concatenate(
        [params['b1'], params['g1'], params['b2'], params['g2']],
        axis=0).astype(jnp.float32)                                             # (4, D)
    return dict(w12=w12, bg=bg,
                wc=params['wc'].astype(weight_dtype),                           # (D, bnum)
                bc=params['bc'].astype(jnp.float32))                            # (1, bnum)


def mlp_gate_forward(x1, x2, prep, temp=1.0, approx_gelu=True):
    """prep: output of prepare_params(). Returns (ret, y_soft) == (y, y)."""
    B, N, D = x1.shape
    bnum = prep['wc'].shape[1]

    # Keeps the (B, N, D) <-> (B*N, D) flatten/unflatten inside the kernel
    # relayout-free (no silent VMEM copies of the intermediates).
    assert N % 8 == 0 and D % 128 == 0, (
        "MLP_Gate Pallas kernel assumes N % 8 == 0 and D % 128 == 0; use "
        "per-batch matmuls or tiling for other shapes.")

    # Whole-problem VMEM residency guard (gridless, no tiling).  The tightest
    # default scoped-VMEM budget is v5e's 16 MiB (v6e/v7x default to 32 MiB of
    # 128/64 MiB physical); stay well under it.  Add row/K tiling (grid +
    # BlockSpecs, 'parallel' row axis for v7x megacore) before scaling D or
    # B*N past this.
    resident_bytes = (
        x1.size * x1.dtype.itemsize + x2.size * x2.dtype.itemsize
        + sum(int(v.size) * v.dtype.itemsize for v in prep.values()))
    assert resident_bytes < 12 * 1024 * 1024, (
        "MLP_Gate Pallas kernel assumes everything fits in VMEM; introduce "
        "tiling before scaling D or B*N this large.")

    inv_tau = jnp.full((1, 1), 1.0 / float(temp), jnp.float32)   # SMEM scalar

    vmem = pl.BlockSpec(memory_space=pltpu.MemorySpace.VMEM)
    smem = pl.BlockSpec(memory_space=pltpu.MemorySpace.SMEM)

    y_soft = pl.pallas_call(
        functools.partial(_mlp_gate_kernel, approx_gelu=approx_gelu),
        out_shape=jax.ShapeDtypeStruct((B, bnum), jnp.float32),
        in_specs=[smem] + [vmem] * 6,
        out_specs=vmem,
    )(inv_tau, x1, x2, prep['w12'], prep['bg'], prep['wc'], prep['bc'])

    # DiffSoftmax with hard=False returns (ret, y_soft) with ret == y_soft.
    # TODO(synk): hard=True straight-through (one-hot scatter) path not
    # implemented; the module's default forward uses hard=False.
    return y_soft, y_soft


def init_params(key, dim, branch_num):
    """Deterministic synthetic init (PyTorch-Linear-like uniform bounds).

    Weights are stored (in, out), i.e. already transposed vs nn.Linear.weight.
    """
    ks = jax.random.split(key, 6)
    bound = 1.0 / jnp.sqrt(dim)

    def lin(kw, kb, out_dim):
        w = jax.random.uniform(kw, (dim, out_dim), jnp.float32, -bound, bound)
        b = jax.random.uniform(kb, (1, out_dim), jnp.float32, -bound, bound)
        return w, b

    w1, b1 = lin(ks[0], ks[1], dim)
    w2, b2 = lin(ks[2], ks[3], dim)
    wc, bc = lin(ks[4], ks[5], branch_num)
    g1 = jnp.ones((1, dim), jnp.float32)   # RMSNorm scale
    g2 = jnp.ones((1, dim), jnp.float32)
    return dict(w1=w1, b1=b1, g1=g1, w2=w2, b2=b2, g2=g2, wc=wc, bc=bc)


def _reference(x1, x2, params, temp, approx_gelu=True):
    """Pure-JAX f32 reference of the MLP_Gate forward (hard=False path)."""
    def branch(x, w, b, g):
        h = x @ w + b
        ms = jnp.mean(h * h, axis=-1, keepdims=True)
        h = h * jax.lax.rsqrt(ms + RMS_EPS) * g
        return jnp.mean(jax.nn.gelu(h, approximate=approx_gelu), axis=1)

    x = branch(x1, params['w1'], params['b1'], params['g1']) \
        + branch(x2, params['w2'], params['b2'], params['g2'])
    logits = x @ params['wc'] + params['bc']
    return jax.nn.softmax(logits / temp, axis=-1)


if __name__ == "__main__":
    B, N, D = 2, 8, 256          # batch, seq, dim (module default dim=256)
    BRANCH_NUM = 4

    key = jax.random.PRNGKey(0)
    kx1, kx2, kp = jax.random.split(key, 3)
    x1 = jax.random.normal(kx1, (B, N, D), jnp.float32)
    x2 = jax.random.normal(kx2, (B, N, D), jnp.float32)
    params = init_params(kp, D, BRANCH_NUM)
    prep = prepare_params(params)          # one-time bf16 cast + packing

    ret, y_soft = mlp_gate_forward(x1, x2, prep, temp=1.0)
    jax.block_until_ready((ret, y_soft))

    assert ret.shape == (B, BRANCH_NUM) and y_soft.shape == (B, BRANCH_NUM)
    # Exact in-kernel normalization -> rows sum to 1 to f32 precision.
    assert jnp.allclose(jnp.sum(y_soft, axis=-1), 1.0, atol=1e-5)
    # Parity with the f32 pure-JAX reference (kernel uses bf16 weights; both
    # use tanh-GELU so the tolerance covers only the bf16 quantization).
    y_ref = _reference(x1, x2, params, temp=1.0, approx_gelu=True)
    assert jnp.allclose(y_soft, y_ref, atol=2e-2), float(jnp.max(jnp.abs(y_soft - y_ref)))
    print("KERNEL_OK")
</pallas_src>

<mosaic_0001>
module attributes {stable_mosaic.version = 11 : i64} {
  func.func @_mlp_gate_kernel(%arg0: memref<1x1xf32, #tpu.memory_space<smem>>, %arg1: memref<2x8x256xf32, #tpu.memory_space<vmem>>, %arg2: memref<2x8x256xf32, #tpu.memory_space<vmem>>, %arg3: memref<2x256x256xbf16, #tpu.memory_space<vmem>>, %arg4: memref<4x256xf32, #tpu.memory_space<vmem>>, %arg5: memref<256x4xbf16, #tpu.memory_space<vmem>>, %arg6: memref<1x4xf32, #tpu.memory_space<vmem>>, %arg7: memref<2x4xf32, #tpu.memory_space<vmem>>) attributes {dimension_semantics = [], scalar_prefetch = 0 : i64, scratch_operands = 0 : i64, tpu.core_type = #tpu.core_type<tc>} {
    %c0 = arith.constant 0 : index
    %c0_0 = arith.constant 0 : index
    %c0_1 = arith.constant 0 : index
    %0 = vector.load %arg1[%c0, %c0_0, %c0_1] : memref<2x8x256xf32, #tpu.memory_space<vmem>>, vector<2x8x256xf32>
    %1 = vector.shape_cast %0 : vector<2x8x256xf32> to vector<16x256xf32>
    %2 = arith.truncf %1 : vector<16x256xf32> to vector<16x256xbf16>
    %c0_2 = arith.constant 0 : index
    %c0_3 = arith.constant 0 : index
    %c0_4 = arith.constant 0 : index
    %3 = vector.load %arg3[%c0_2, %c0_3, %c0_4] : memref<2x256x256xbf16, #tpu.memory_space<vmem>>, vector<1x256x256xbf16>
    %4 = vector.shape_cast %3 : vector<1x256x256xbf16> to vector<256x256xbf16>
    %cst = arith.constant dense<0.000000e+00> : vector<16x256xf32>
    %5 = tpu.matmul %2, %4, %cst {dimension_numbers = #tpu.dot_dimension_numbers<[1], [0], [0], [1], [0, 0, 1, 1], [], []>} : vector<16x256xbf16>, vector<256x256xbf16>, vector<16x256xf32> -> vector<16x256xf32>
    %c0_5 = arith.constant 0 : index
    %c0_6 = arith.constant 0 : index
    %6 = vector.load %arg4[%c0_5, %c0_6] : memref<4x256xf32, #tpu.memory_space<vmem>>, vector<1x256xf32>
    %7 = vector.shape_cast %6 : vector<1x256xf32> to vector<256xf32>
    %8 = vector.shape_cast %7 : vector<256xf32> to vector<1x256xf32>
    %9 = vector.broadcast %8 : vector<1x256xf32> to vector<16x256xf32>
    %10 = arith.addf %5, %9 : vector<16x256xf32>
    %11 = arith.mulf %10, %10 : vector<16x256xf32>
    %cst_7 = arith.constant dense<0.000000e+00> : vector<16xf32>
    %12 = vector.multi_reduction <add>, %11, %cst_7 [1] : vector<16x256xf32> to vector<16xf32>
    %13 = vector.shape_cast %12 : vector<16xf32> to vector<16x1xf32>
    %cst_8 = arith.constant 2.560000e+02 : f32
    %14 = vector.broadcast %cst_8 : f32 to vector<16x1xf32>
    %15 = arith.divf %13, %14 : vector<16x1xf32>
    %cst_9 = arith.constant 9.99999997E-7 : f32
    %16 = vector.broadcast %cst_9 : f32 to vector<16x1xf32>
    %17 = arith.addf %15, %16 : vector<16x1xf32>
    %18 = math.rsqrt %17 : vector<16x1xf32>
    %19 = vector.broadcast %18 : vector<16x1xf32> to vector<16x256xf32>
    %20 = arith.mulf %10, %19 : vector<16x256xf32>
    %c1 = arith.constant 1 : index
    %c0_10 = arith.constant 0 : index
    %21 = vector.load %arg4[%c1, %c0_10] : memref<4x256xf32, #tpu.memory_space<vmem>>, vector<1x256xf32>
    %22 = vector.shape_cast %21 : vector<1x256xf32> to vector<256xf32>
    %23 = vector.shape_cast %22 : vector<256xf32> to vector<1x256xf32>
    %24 = vector.broadcast %23 : vector<1x256xf32> to vector<16x256xf32>
    %25 = arith.mulf %20, %24 : vector<16x256xf32>
    %26 = arith.mulf %25, %25 : vector<16x256xf32>
    %27 = arith.mulf %25, %26 : vector<16x256xf32>
    %cst_11 = arith.constant 4.471500e-02 : f32
    %28 = vector.broadcast %cst_11 : f32 to vector<16x256xf32>
    %29 = arith.mulf %28, %27 : vector<16x256xf32>
    %30 = arith.addf %25, %29 : vector<16x256xf32>
    %cst_12 = arith.constant 0.797884583 : f32
    %31 = vector.broadcast %cst_12 : f32 to vector<16x256xf32>
    %32 = arith.mulf %31, %30 : vector<16x256xf32>
    %33 = math.tanh %32 : vector<16x256xf32>
    %cst_13 = arith.constant 1.000000e+00 : f32
    %34 = vector.broadcast %cst_13 : f32 to vector<16x256xf32>
    %35 = arith.addf %34, %33 : vector<16x256xf32>
    %cst_14 = arith.constant 5.000000e-01 : f32
    %36 = vector.broadcast %cst_14 : f32 to vector<16x256xf32>
    %37 = arith.mulf %36, %35 : vector<16x256xf32>
    %38 = arith.mulf %25, %37 : vector<16x256xf32>
    %39 = vector.shape_cast %38 : vector<16x256xf32> to vector<2x8x256xf32>
    %cst_15 = arith.constant dense<0.000000e+00> : vector<2x256xf32>
    %40 = vector.multi_reduction <add>, %39, %cst_15 [1] : vector<2x8x256xf32> to vector<2x256xf32>
    %cst_16 = arith.constant 8.000000e+00 : f32
    %41 = vector.broadcast %cst_16 : f32 to vector<2x256xf32>
    %42 = arith.divf %40, %41 : vector<2x256xf32>
    %c0_17 = arith.constant 0 : index
    %c0_18 = arith.constant 0 : index
    %c0_19 = arith.constant 0 : index
    %43 = vector.load %arg2[%c0_17, %c0_18, %c0_19] : memref<2x8x256xf32, #tpu.memory_space<vmem>>, vector<2x8x256xf32>
    %44 = vector.shape_cast %43 : vector<2x8x256xf32> to vector<16x256xf32>
    %45 = arith.truncf %44 : vector<16x256xf32> to vector<16x256xbf16>
    %c1_20 = arith.constant 1 : index
    %c0_21 = arith.constant 0 : index
    %c0_22 = arith.constant 0 : index
    %46 = vector.load %arg3[%c1_20, %c0_21, %c0_22] : memref<2x256x256xbf16, #tpu.memory_space<vmem>>, vector<1x256x256xbf16>
    %47 = vector.shape_cast %46 : vector<1x256x256xbf16> to vector<256x256xbf16>
    %cst_23 = arith.constant dense<0.000000e+00> : vector<16x256xf32>
    %48 = tpu.matmul %45, %47, %cst_23 {dimension_numbers = #tpu.dot_dimension_numbers<[1], [0], [0], [1], [0, 0, 1, 1], [], []>} : vector<16x256xbf16>, vector<256x256xbf16>, vector<16x256xf32> -> vector<16x256xf32>
    %c2 = arith.constant 2 : index
    %c0_24 = arith.constant 0 : index
    %49 = vector.load %arg4[%c2, %c0_24] : memref<4x256xf32, #tpu.memory_space<vmem>>, vector<1x256xf32>
    %50 = vector.shape_cast %49 : vector<1x256xf32> to vector<256xf32>
    %51 = vector.shape_cast %50 : vector<256xf32> to vector<1x256xf32>
    %52 = vector.broadcast %51 : vector<1x256xf32> to vector<16x256xf32>
    %53 = arith.addf %48, %52 : vector<16x256xf32>
    %54 = arith.mulf %53, %53 : vector<16x256xf32>
    %cst_25 = arith.constant dense<0.000000e+00> : vector<16xf32>
    %55 = vector.multi_reduction <add>, %54, %cst_25 [1] : vector<16x256xf32> to vector<16xf32>
    %56 = vector.shape_cast %55 : vector<16xf32> to vector<16x1xf32>
    %cst_26 = arith.constant 2.560000e+02 : f32
    %57 = vector.broadcast %cst_26 : f32 to vector<16x1xf32>
    %58 = arith.divf %56, %57 : vector<16x1xf32>
    %cst_27 = arith.constant 9.99999997E-7 : f32
    %59 = vector.broadcast %cst_27 : f32 to vector<16x1xf32>
    %60 = arith.addf %58, %59 : vector<16x1xf32>
    %61 = math.rsqrt %60 : vector<16x1xf32>
    %62 = vector.broadcast %61 : vector<16x1xf32> to vector<16x256xf32>
    %63 = arith.mulf %53, %62 : vector<16x256xf32>
    %c3 = arith.constant 3 : index
    %c0_28 = arith.constant 0 : index
    %64 = vector.load %arg4[%c3, %c0_28] : memref<4x256xf32, #tpu.memory_space<vmem>>, vector<1x256xf32>
    %65 = vector.shape_cast %64 : vector<1x256xf32> to vector<256xf32>
    %66 = vector.shape_cast %65 : vector<256xf32> to vector<1x256xf32>
    %67 = vector.broadcast %66 : vector<1x256xf32> to vector<16x256xf32>
    %68 = arith.mulf %63, %67 : vector<16x256xf32>
    %69 = arith.mulf %68, %68 : vector<16x256xf32>
    %70 = arith.mulf %68, %69 : vector<16x256xf32>
    %cst_29 = arith.constant 4.471500e-02 : f32
    %71 = vector.broadcast %cst_29 : f32 to vector<16x256xf32>
    %72 = arith.mulf %71, %70 : vector<16x256xf32>
    %73 = arith.addf %68, %72 : vector<16x256xf32>
    %cst_30 = arith.constant 0.797884583 : f32
    %74 = vector.broadcast %cst_30 : f32 to vector<16x256xf32>
    %75 = arith.mulf %74, %73 : vector<16x256xf32>
    %76 = math.tanh %75 : vector<16x256xf32>
    %cst_31 = arith.constant 1.000000e+00 : f32
    %77 = vector.broadcast %cst_31 : f32 to vector<16x256xf32>
    %78 = arith.addf %77, %76 : vector<16x256xf32>
    %cst_32 = arith.constant 5.000000e-01 : f32
    %79 = vector.broadcast %cst_32 : f32 to vector<16x256xf32>
    %80 = arith.mulf %79, %78 : vector<16x256xf32>
    %81 = arith.mulf %68, %80 : vector<16x256xf32>
    %82 = vector.shape_cast %81 : vector<16x256xf32> to vector<2x8x256xf32>
    %cst_33 = arith.constant dense<0.000000e+00> : vector<2x256xf32>
    %83 = vector.multi_reduction <add>, %82, %cst_33 [1] : vector<2x8x256xf32> to vector<2x256xf32>
    %cst_34 = arith.constant 8.000000e+00 : f32
    %84 = vector.broadcast %cst_34 : f32 to vector<2x256xf32>
    %85 = arith.divf %83, %84 : vector<2x256xf32>
    %86 = arith.addf %42, %85 : vector<2x256xf32>
    %87 = arith.truncf %86 : vector<2x256xf32> to vector<2x256xbf16>
    %c0_35 = arith.constant 0 : index
    %c0_36 = arith.constant 0 : index
    %88 = vector.load %arg5[%c0_35, %c0_36] : memref<256x4xbf16, #tpu.memory_space<vmem>>, vector<256x4xbf16>
    %cst_37 = arith.constant dense<0.000000e+00> : vector<2x4xf32>
    %89 = tpu.matmul %87, %88, %cst_37 {dimension_numbers = #tpu.dot_dimension_numbers<[1], [0], [0], [1], [0, 0, 1, 1], [], []>} : vector<2x256xbf16>, vector<256x4xbf16>, vector<2x4xf32> -> vector<2x4xf32>
    %c0_38 = arith.constant 0 : index
    %c0_39 = arith.constant 0 : index
    %90 = vector.load %arg6[%c0_38, %c0_39] : memref<1x4xf32, #tpu.memory_space<vmem>>, vector<1x4xf32>
    %91 = vector.broadcast %90 : vector<1x4xf32> to vector<2x4xf32>
    %92 = arith.addf %89, %91 : vector<2x4xf32>
    %c0_40 = arith.constant 0 : index
    %c0_41 = arith.constant 0 : index
    %93 = memref.load %arg0[%c0_40, %c0_41] : memref<1x1xf32, #tpu.memory_space<smem>>
    %94 = vector.broadcast %93 : f32 to vector<2x4xf32>
    %95 = arith.mulf %92, %94 : vector<2x4xf32>
    %cst_42 = arith.constant dense<0xFF800000> : vector<2xf32>
    %96 = vector.multi_reduction <maximumf>, %95, %cst_42 [1] : vector<2x4xf32> to vector<2xf32>
    %97 = vector.shape_cast %96 : vector<2xf32> to vector<2x1xf32>
    %98 = vector.broadcast %97 : vector<2x1xf32> to vector<2x4xf32>
    %99 = arith.subf %95, %98 : vector<2x4xf32>
    %100 = math.exp %99 : vector<2x4xf32>
    %cst_43 = arith.constant dense<0.000000e+00> : vector<2xf32>
    %101 = vector.multi_reduction <add>, %100, %cst_43 [1] : vector<2x4xf32> to vector<2xf32>
    %102 = vector.shape_cast %101 : vector<2xf32> to vector<2x1xf32>
    %103 = vector.broadcast %102 : vector<2x1xf32> to vector<2x4xf32>
    %104 = arith.divf %100, %103 : vector<2x4xf32>
    %c0_44 = arith.constant 0 : index
    %c0_45 = arith.constant 0 : index
    %105 = vector.load %arg7[%c0_44, %c0_45] : memref<2x4xf32, #tpu.memory_space<vmem>>, vector<2x4xf32>
    tpu.vector_store %arg7[%c0_44, %c0_45], %104 {strides = array<i32>} : memref<2x4xf32, #tpu.memory_space<vmem>>, vector<2x4xf32>,
    return
  }
}

</mosaic_0001>

<llo_original>
// kernel: tpu_custom_call.1
$region0: #{tpu_custom_call.1}
  #allocation0 [shape = 'u32[]', space=smem, size = 0x4, offset = 0x4, fixed_abs, tag = 'smem constant byte address 0x4 - core index']
  #allocation1 [shape = 'u32[144,128]{1,0:T(1,128)}', space=vmem, size = 0x12000, scoped, tag = 'internal scratch']
  #allocation2 [shape = 'f32[1,1]{1,0:T(1,128)S(6)}', space=smem, size = 0x200, scoped, tag = 'scoped memory for tpu_custom_call.1']
  %s0 = inlined_call_operand.<no memory space> [shape: f32[1,1], index: 0, kind: input, shape index: {}]
  %s1 = inlined_call_operand.vmem [shape: f32[2,8,256], index: 1, kind: input, shape index: {}]
  %s2 = inlined_call_operand.vmem [shape: f32[2,8,256], index: 2, kind: input, shape index: {}]
  %s3 = inlined_call_operand.hbm [shape: bf16[2,256,256], index: 3, kind: input, shape index: {}]
  %s4 = inlined_call_operand.vmem [shape: f32[4,256], index: 4, kind: input, shape index: {}]
  %s5 = inlined_call_operand.vmem [shape: bf16[256,4], index: 5, kind: input, shape index: {}]
  %s6 = inlined_call_operand.vmem [shape: f32[1,4], index: 6, kind: input, shape index: {}]
  %s7 = inlined_call_operand.hbm [shape: f32[2,4], index: 7, kind: output, shape index: {}]
  %s8 = sld [smem:[#allocation0]]
  $region42: #{tpu_custom_call.1} parent=0
    _
  %s10 = ssub.s32 1, %s8
  %s11 = scalar_select 0, %s10, %s8
  %12 = sst [smem:[#allocation2]] %s0
  $region1: #{tpu_custom_call.1} parent=0
    #allocation3 [shape = 'u8[262144]{0}', space=vmem, size = 0x40000, scoped, tag = 'input window, operand 3, single buffered']
    #allocation4 [shape = 's32[1]{0}', space=sflag, size = 0x4, scoped, tag = 'scoped memory for tpu_custom_call.1']
    #allocation5 [shape = 's32[1]{0}', space=sflag, size = 0x4, scoped, tag = 'scoped memory for tpu_custom_call.1']
    #allocation6 [shape = 'u8[1024]{0}', space=vmem, size = 0x400, scoped, tag = 'output window, operand 0, single buffered']
    %13 = vsyncpa [#allocation4], 0
    %14 = vsyncpa [#allocation5], 0
    // Predicated region
    $region2: #{tpu_custom_call.1} parent=1 // pred_check
      _
    $region3: #{tpu_custom_call.1} parent=1 // pred_check_branch
      %16 = sbr.rel (0) target = $region5
    $region4: #{tpu_custom_call.1} parent=1 // pred_region
      _
    $region5: #{tpu_custom_call.1} parent=1 // pred_fallthru
      _
    // Predicated region
    $region6: #{tpu_custom_call.1} parent=1 // pred_check
      _
    $region7: #{tpu_custom_call.1} parent=1 // pred_check_branch
      %18 = sbr.rel (0) target = $region9
    $region8: #{tpu_custom_call.1} parent=1 // pred_region
      _
    $region9: #{tpu_custom_call.1} parent=1 // pred_fallthru
      _
    // Predicated region
    $region10: #{tpu_custom_call.1} parent=1 // pred_check
      _
    $region11: #{tpu_custom_call.1} parent=1 // pred_check_branch
      %20 = sbr.rel (0) target = $region13
    $region12: #{tpu_custom_call.1} parent=1 // pred_region
      _
    $region13: #{tpu_custom_call.1} parent=1 // pred_fallthru
      _
    // Predicated region
    $region14: #{tpu_custom_call.1} parent=1 // pred_check
      _
    $region15: #{tpu_custom_call.1} parent=1 // pred_check_branch
      %22 = sbr.rel (0) target = $region17
    $region16: #{tpu_custom_call.1} parent=1 // pred_region
      %s24 = ssub.s32 8192, 8192
      %25 = vsyncadd [#allocation4], %s24
      %s26 = sshll.u32 [#allocation3], 4
      %s27 = int_to_ptr.vmem [resolvable:$true] %s26
      %32 = dma.hbm_to_vmem [thread:$0]  %s3, 8192, %s27, [#allocation4], 128, 128, 8
    $region17: #{tpu_custom_call.1} parent=1 // pred_fallthru
      _
    // Predicated region
    $region18: #{tpu_custom_call.1} parent=1 // pred_check
      _
    $region19: #{tpu_custom_call.1} parent=1 // pred_check_branch
      %34 = sbr.rel (0) target = $region21
    $region20: #{tpu_custom_call.1} parent=1 // pred_region
      _
    $region21: #{tpu_custom_call.1} parent=1 // pred_fallthru
      _
    // Predicated region
    $region22: #{tpu_custom_call.1} parent=1 // pred_check
      _
    $region23: #{tpu_custom_call.1} parent=1 // pred_check_branch
      %36 = sbr.rel (0) target = $region25
    $region24: #{tpu_custom_call.1} parent=1 // pred_region
      _
    $region25: #{tpu_custom_call.1} parent=1 // pred_fallthru
      _
    // Predicated region
    $region26: #{tpu_custom_call.1} parent=1 // pred_check
      _
    $region27: #{tpu_custom_call.1} parent=1 // pred_check_branch
      %38 = sbr.rel (0) target = $region29
    $region28: #{tpu_custom_call.1} parent=1 // pred_region
      _
    $region29: #{tpu_custom_call.1} parent=1 // pred_fallthru
      _
    // Predicated region
    $region30: #{tpu_custom_call.1} parent=1 // pred_check
      _
    $region31: #{tpu_custom_call.1} parent=1 // pred_check_branch
      %40 = sbr.rel (0) target = $region33
    $region32: #{tpu_custom_call.1} parent=1 // pred_region
      %41 = dma.done [#allocation4], 8192
    $region33: #{tpu_custom_call.1} parent=1 // pred_fallthru
      _
    %v43 = vld [vmem:[%s1] sm:$0xff]
    %v44 = vld [vmem:[%s1 + $0x8] sm:$0xff]
    %v45 = vld [vmem:[%s1 + $0x10] sm:$0xff]
    %v46 = vld [vmem:[%s1 + $0x18] sm:$0xff]
    %v47 = vpack.c.bf16 %v45, %v43
    %v48 = vpack.c.bf16 %v46, %v44
    %v49 = vld [vmem:[#allocation3] sm:$0xff]
    %v50 = vld [vmem:[#allocation3 + $0x8] sm:$0xff]
    %v51 = vld [vmem:[#allocation3 + $0x10] sm:$0xff]
    %v52 = vld [vmem:[#allocation3 + $0x18] sm:$0xff]
    %v53 = vld [vmem:[#allocation3 + $0x20] sm:$0xff]
    %v54 = vld [vmem:[#allocation3 + $0x28] sm:$0xff]
    %v55 = vld [vmem:[#allocation3 + $0x30] sm:$0xff]
    %v56 = vld [vmem:[#allocation3 + $0x38] sm:$0xff]
    %v57 = vld [vmem:[#allocation3 + $0x40] sm:$0xff]
    %v58 = vld [vmem:[#allocation3 + $0x48] sm:$0xff]
    %v59 = vld [vmem:[#allocation3 + $0x50] sm:$0xff]
    %v60 = vld [vmem:[#allocation3 + $0x58] sm:$0xff]
    %v61 = vld [vmem:[#allocation3 + $0x60] sm:$0xff]
    %v62 = vld [vmem:[#allocation3 + $0x68] sm:$0xff]
    %v63 = vld [vmem:[#allocation3 + $0x70] sm:$0xff]
    %v64 = vld [vmem:[#allocation3 + $0x78] sm:$0xff]
    %v65 = vld [vmem:[#allocation3 + $0x80] sm:$0xff]
    %v66 = vld [vmem:[#allocation3 + $0x88] sm:$0xff]
    %v67 = vld [vmem:[#allocation3 + $0x90] sm:$0xff]
    %v68 = vld [vmem:[#allocation3 + $0x98] sm:$0xff]
    %v69 = vld [vmem:[#allocation3 + $0xa0] sm:$0xff]
    %v70 = vld [vmem:[#allocation3 + $0xa8] sm:$0xff]
    %v71 = vld [vmem:[#allocation3 + $0xb0] sm:$0xff]
    %v72 = vld [vmem:[#allocation3 + $0xb8] sm:$0xff]
    %v73 = vld [vmem:[#allocation3 + $0xc0] sm:$0xff]
    %v74 = vld [vmem:[#allocation3 + $0xc8] sm:$0xff]
    %v75 = vld [vmem:[#allocation3 + $0xd0] sm:$0xff]
    %v76 = vld [vmem:[#allocation3 + $0xd8] sm:$0xff]
    %v77 = vld [vmem:[#allocation3 + $0xe0] sm:$0xff]
    %v78 = vld [vmem:[#allocation3 + $0xe8] sm:$0xff]
    %v79 = vld [vmem:[#allocation3 + $0xf0] sm:$0xff]
    %v80 = vld [vmem:[#allocation3 + $0xf8] sm:$0xff]
    %v81 = vld [vmem:[%s4] ss:$4 sm:$0x3]
    %v83 = vlaneseq
    %v84 = vshrl.u32 %v83, 7
    %v85 = vsub.s32 0, %v84
    %v86 = vrot.slane %v81, %v85
    %v87 = vlaneseq
    %v88 = vshrl.u32 %v87, 7
    %v89 = vsub.s32 1, %v88
    %v90 = vrot.slane %v81, %v89
    %v125 = vunpack.c.l.b16 %v49
    %v126 = vunpack.c.h.b16 %v49
    %v127 = vunpack.c.l.b16 %v50
    %v128 = vunpack.c.h.b16 %v50
    %v129 = vunpack.c.l.b16 %v51
    %v130 = vunpack.c.h.b16 %v51
    %v131 = vunpack.c.l.b16 %v52
    %v132 = vunpack.c.h.b16 %v52
    %v133 = vunpack.c.l.b16 %v53
    %v134 = vunpack.c.h.b16 %v53
    %v135 = vunpack.c.l.b16 %v54
    %v136 = vunpack.c.h.b16 %v54
    %v137 = vunpack.c.l.b16 %v55
    %v138 = vunpack.c.h.b16 %v55
    %v139 = vunpack.c.l.b16 %v56
    %v140 = vunpack.c.h.b16 %v56
    %v141 = vunpack.c.l.b16 %v57
    %v142 = vunpack.c.h.b16 %v57
    %v143 = vunpack.c.l.b16 %v58
    %v144 = vunpack.c.h.b16 %v58
    %v145 = vunpack.c.l.b16 %v59
    %v146 = vunpack.c.h.b16 %v59
    %v147 = vunpack.c.l.b16 %v60
    %v148 = vunpack.c.h.b16 %v60
    %v149 = vunpack.c.l.b16 %v61
    %v150 = vunpack.c.h.b16 %v61
    %v151 = vunpack.c.l.b16 %v62
    %v152 = vunpack.c.h.b16 %v62
    %v153 = vunpack.c.l.b16 %v63
    %v154 = vunpack.c.h.b16 %v63
    %v155 = vunpack.c.l.b16 %v64
    %v156 = vunpack.c.h.b16 %v64
    %v157 = vunpack.c.l.b16 %v65
    %v158 = vunpack.c.h.b16 %v65
    %v159 = vunpack.c.l.b16 %v66
    %v160 = vunpack.c.h.b16 %v66
    %v161 = vunpack.c.l.b16 %v67
    %v162 = vunpack.c.h.b16 %v67
    %v163 = vunpack.c.l.b16 %v68
    %v164 = vunpack.c.h.b16 %v68
    %v165 = vunpack.c.l.b16 %v69
    %v166 = vunpack.c.h.b16 %v69
    %v167 = vunpack.c.l.b16 %v70
    %v168 = vunpack.c.h.b16 %v70
    %v169 = vunpack.c.l.b16 %v71
    %v170 = vunpack.c.h.b16 %v71
    %v171 = vunpack.c.l.b16 %v72
    %v172 = vunpack.c.h.b16 %v72
    %v173 = vunpack.c.l.b16 %v73
    %v174 = vunpack.c.h.b16 %v73
    %v175 = vunpack.c.l.b16 %v74
    %v176 = vunpack.c.h.b16 %v74
    %v177 = vunpack.c.l.b16 %v75
    %v178 = vunpack.c.h.b16 %v75
    %v179 = vunpack.c.l.b16 %v76
    %v180 = vunpack.c.h.b16 %v76
    %v181 = vunpack.c.l.b16 %v77
    %v182 = vunpack.c.h.b16 %v77
    %v183 = vunpack.c.l.b16 %v78
    %v184 = vunpack.c.h.b16 %v78
    %v185 = vunpack.c.l.b16 %v79
    %v186 = vunpack.c.h.b16 %v79
    %v187 = vunpack.c.l.b16 %v80
    %v188 = vunpack.c.h.b16 %v80
    %v189 = vpack.c.b16 %v127, %v125
    %v190 = vpack.c.b16 %v128, %v126
    %v191 = vpack.c.b16 %v131, %v129
    %v192 = vpack.c.b16 %v132, %v130
    %v193 = vpack.c.b16 %v135, %v133
    %v194 = vpack.c.b16 %v136, %v134
    %v195 = vpack.c.b16 %v139, %v137
    %v196 = vpack.c.b16 %v140, %v138
    %v197 = vpack.c.b16 %v143, %v141
    %v198 = vpack.c.b16 %v144, %v142
    %v199 = vpack.c.b16 %v147, %v145
    %v200 = vpack.c.b16 %v148, %v146
    %v201 = vpack.c.b16 %v151, %v149
    %v202 = vpack.c.b16 %v152, %v150
    %v203 = vpack.c.b16 %v155, %v153
    %v204 = vpack.c.b16 %v156, %v154
    %v205 = vpack.c.b16 %v159, %v157
    %v206 = vpack.c.b16 %v160, %v158
    %v207 = vpack.c.b16 %v163, %v161
    %v208 = vpack.c.b16 %v164, %v162
    %v209 = vpack.c.b16 %v167, %v165
    %v210 = vpack.c.b16 %v168, %v166
    %v211 = vpack.c.b16 %v171, %v169
    %v212 = vpack.c.b16 %v172, %v170
    %v213 = vpack.c.b16 %v175, %v173
    %v214 = vpack.c.b16 %v176, %v174
    %v215 = vpack.c.b16 %v179, %v177
    %v216 = vpack.c.b16 %v180, %v178
    %v217 = vpack.c.b16 %v183, %v181
    %v218 = vpack.c.b16 %v184, %v182
    %v219 = vpack.c.b16 %v187, %v185
    %v220 = vpack.c.b16 %v188, %v186
    %253 = vmatprep.subr.bf16.mxu0 %v190
    %254 = vmatpush1.bf16.msra.mxu0 %v189
    %255 = vmatprep.subr.bf16.mxu0 %v192
    %256 = vmatpush1.bf16.msra.mxu0 %v191
    %257 = vmatprep.subr.bf16.mxu0 %v194
    %258 = vmatpush1.bf16.msra.mxu0 %v193
    %259 = vmatprep.subr.bf16.mxu0 %v196
    %260 = vmatpush1.bf16.msra.mxu0 %v195
    %261 = vmatprep.subr.bf16.mxu0 %v198
    %262 = vmatpush1.bf16.msra.mxu0 %v197
    %263 = vmatprep.subr.bf16.mxu0 %v200
    %264 = vmatpush1.bf16.msra.mxu0 %v199
    %265 = vmatprep.subr.bf16.mxu0 %v202
    %266 = vmatpush1.bf16.msra.mxu0 %v201
    %267 = vmatprep.subr.bf16.mxu0 %v204
    %268 = vmatpush1.bf16.msra.mxu0 %v203
    %269 = vmatprep.subr.bf16.mxu0 %v206
    %270 = vmatpush1.bf16.msra.mxu0 %v205
    %271 = vmatprep.subr.bf16.mxu0 %v208
    %272 = vmatpush1.bf16.msra.mxu0 %v207
    %273 = vmatprep.subr.bf16.mxu0 %v210
    %274 = vmatpush1.bf16.msra.mxu0 %v209
    %275 = vmatprep.subr.bf16.mxu0 %v212
    %276 = vmatpush1.bf16.msra.mxu0 %v211
    %277 = vmatprep.subr.bf16.mxu0 %v214
    %278 = vmatpush1.bf16.msra.mxu0 %v213
    %279 = vmatprep.subr.bf16.mxu0 %v216
    %280 = vmatpush1.bf16.msra.mxu0 %v215
    %281 = vmatprep.subr.bf16.mxu0 %v218
    %282 = vmatpush1.bf16.msra.mxu0 %v217
    %283 = vmatprep.subr.bf16.mxu0 %v220
    %284 = vmatpush1.bf16.msra.mxu0 %v219
    %285 = vmatprep.mubr.bf16.mxu0 %v48
    %286 = vmatmul.mubr.bf16.gmra.mrb[0].mxu0 %v47
    %v287 = vpop.f32.mrb[0].mxu0
    %v288 = vadd.f32 %v86, %v287
    %v289 = vpop.f32.mrb[0].mxu0
    %v290 = vadd.f32 %v90, %v289
    %v291 = vpop.f32.mrb[0].mxu0
    %v292 = vadd.f32 %v86, %v291
    %v293 = vpop.f32.mrb[0].mxu0
    %v294 = vadd.f32 %v90, %v293
    %295 = vdwg.mxu0
    %v296 = vmul.f32 %v288, %v288
    %v297 = vmul.f32 %v290, %v290
    %v298 = vmul.f32 %v292, %v292
    %v299 = vmul.f32 %v294, %v294
    %v300 = vadd.f32 %v296, %v297
    %301 = vadd.xlane.f32.xlu0 %v300
    %v302 = vpop.xlane.xlu0 %301
    %v303 = vadd.f32 %v298, %v299
    %304 = vadd.xlane.f32.xlu0 %v303
    %v305 = vpop.xlane.xlu0 %304
    %v306 = vrcp.pop 256.0
    %v307 = vmul.f32 %v302, %v306
    %v308 = vmul.f32 %v305, %v306
    %v309 = vadd.f32 %v307, 1e-06
    %v310 = vadd.f32 %v308, 1e-06
    %v311 = vrsqrt.pop %v309
    %v312 = vrsqrt.pop %v310
    %v313 = vmul.f32 %v288, %v311
    %v314 = vmul.f32 %v290, %v311
    %v315 = vmul.f32 %v292, %v312
    %v316 = vmul.f32 %v294, %v312
    %s317 = scalar_lea.vmem %s4, 1
    %v318 = vld [vmem:[%s317] ss:$4 sm:$0x3]
    %v320 = vlaneseq
    %v321 = vshrl.u32 %v320, 7
    %v322 = vsub.s32 0, %v321
    %v323 = vrot.slane %v318, %v322
    %v324 = vlaneseq
    %v325 = vshrl.u32 %v324, 7
    %v326 = vsub.s32 1, %v325
    %v327 = vrot.slane %v318, %v326
    %v330 = vmul.f32 %v313, %v323
    %v331 = vmul.f32 %v314, %v327
    %v332 = vmul.f32 %v315, %v323
    %v333 = vmul.f32 %v316, %v327
    %v334 = vmul.f32 %v330, %v330
    %v335 = vmul.f32 %v331, %v331
    %v336 = vmul.f32 %v332, %v332
    %v337 = vmul.f32 %v333, %v333
    %v338 = vmul.f32 %v330, %v334
    %v339 = vmul.f32 %v331, %v335
    %v340 = vmul.f32 %v332, %v336
    %v341 = vmul.f32 %v333, %v337
    %v342 = vmul.f32 %v338, 0.044715
    %v343 = vmul.f32 %v339, 0.044715
    %v344 = vmul.f32 %v340, 0.044715
    %v345 = vmul.f32 %v341, 0.044715
    %v346 = vadd.f32 %v330, %v342
    %v347 = vadd.f32 %v331, %v343
    %v348 = vadd.f32 %v332, %v344
    %v349 = vadd.f32 %v333, %v345
    %v350 = vmul.f32 %v346, 0.7978846
    %v351 = vmul.f32 %v347, 0.7978846
    %v352 = vmul.f32 %v348, 0.7978846
    %v353 = vmul.f32 %v349, 0.7978846
    %v354 = vtanh.pop %v350
    %v355 = vtanh.pop %v351
    %v356 = vtanh.pop %v352
    %v357 = vtanh.pop %v353
    %v358 = vadd.f32 %v354, 1.0
    %v359 = vadd.f32 %v355, 1.0
    %v360 = vadd.f32 %v356, 1.0
    %v361 = vadd.f32 %v357, 1.0
    %v362 = vmul.f32 %v358, 0.5
    %v363 = vmul.f32 %v359, 0.5
    %v364 = vmul.f32 %v360, 0.5
    %v365 = vmul.f32 %v361, 0.5
    %v366 = vmul.f32 %v330, %v362
    %v367 = vmul.f32 %v331, %v363
    %v368 = vmul.f32 %v332, %v364
    %v369 = vmul.f32 %v333, %v365
    %v370 = vrot.slane %v366, 4
    %v371 = vadd.f32 %v366, %v370
    %v372 = vrot.slane %v371, 2
    %v373 = vadd.f32 %v371, %v372
    %v374 = vrot.slane %v373, 1
    %v375 = vadd.f32 %v373, %v374
    %v376 = vrot.slane %v367, 4
    %v377 = vadd.f32 %v367, %v376
    %v378 = vrot.slane %v377, 2
    %v379 = vadd.f32 %v377, %v378
    %v380 = vrot.slane %v379, 1
    %v381 = vadd.f32 %v379, %v380
    %v382 = vrot.slane %v368, 4
    %v383 = vadd.f32 %v368, %v382
    %v384 = vrot.slane %v383, 2
    %v385 = vadd.f32 %v383, %v384
    %v386 = vrot.slane %v385, 1
    %v387 = vadd.f32 %v385, %v386
    %v388 = vrot.slane %v369, 4
    %v389 = vadd.f32 %v369, %v388
    %v390 = vrot.slane %v389, 2
    %v391 = vadd.f32 %v389, %v390
    %v392 = vrot.slane %v391, 1
    %v393 = vadd.f32 %v391, %v392
    %v394 = vrcp.pop 8.0
    %v395 = vmul.f32 %v375, %v394
    %v396 = vmul.f32 %v381, %v394
    %v397 = vmul.f32 %v387, %v394
    %v398 = vmul.f32 %v393, %v394
    %v399 = vld [vmem:[%s2] sm:$0xff]
    %v400 = vld [vmem:[%s2 + $0x8] sm:$0xff]
    %v401 = vld [vmem:[%s2 + $0x10] sm:$0xff]
    %v402 = vld [vmem:[%s2 + $0x18] sm:$0xff]
    %v403 = vpack.c.bf16 %v401, %v399
    %v404 = vpack.c.bf16 %v402, %v400
    %s405 = scalar_lea.vmem [#allocation3], 256
    %v406 = vld [vmem:[%s405] sm:$0xff]
    %v407 = vld [vmem:[%s405 + $0x8] sm:$0xff]
    %v408 = vld [vmem:[%s405 + $0x10] sm:$0xff]
    %v409 = vld [vmem:[%s405 + $0x18] sm:$0xff]
    %v410 = vld [vmem:[%s405 + $0x20] sm:$0xff]
    %v411 = vld [vmem:[%s405 + $0x28] sm:$0xff]
    %v412 = vld [vmem:[%s405 + $0x30] sm:$0xff]
    %v413 = vld [vmem:[%s405 + $0x38] sm:$0xff]
    %v414 = vld [vmem:[%s405 + $0x40] sm:$0xff]
    %v415 = vld [vmem:[%s405 + $0x48] sm:$0xff]
    %v416 = vld [vmem:[%s405 + $0x50] sm:$0xff]
    %v417 = vld [vmem:[%s405 + $0x58] sm:$0xff]
    %v418 = vld [vmem:[%s405 + $0x60] sm:$0xff]
    %v419 = vld [vmem:[%s405 + $0x68] sm:$0xff]
    %v420 = vld [vmem:[%s405 + $0x70] sm:$0xff]
    %v421 = vld [vmem:[%s405 + $0x78] sm:$0xff]
    %v422 = vld [vmem:[%s405 + $0x80] sm:$0xff]
    %v423 = vld [vmem:[%s405 + $0x88] sm:$0xff]
    %v424 = vld [vmem:[%s405 + $0x90] sm:$0xff]
    %v425 = vld [vmem:[%s405 + $0x98] sm:$0xff]
    %v426 = vld [vmem:[%s405 + $0xa0] sm:$0xff]
    %v427 = vld [vmem:[%s405 + $0xa8] sm:$0xff]
    %v428 = vld [vmem:[%s405 + $0xb0] sm:$0xff]
    %v429 = vld [vmem:[%s405 + $0xb8] sm:$0xff]
    %v430 = vld [vmem:[%s405 + $0xc0] sm:$0xff]
    %v431 = vld [vmem:[%s405 + $0xc8] sm:$0xff]
    %v432 = vld [vmem:[%s405 + $0xd0] sm:$0xff]
    %v433 = vld [vmem:[%s405 + $0xd8] sm:$0xff]
    %v434 = vld [vmem:[%s405 + $0xe0] sm:$0xff]
    %v435 = vld [vmem:[%s405 + $0xe8] sm:$0xff]
    %v436 = vld [vmem:[%s405 + $0xf0] sm:$0xff]
    %v437 = vld [vmem:[%s405 + $0xf8] sm:$0xff]
    %s438 = scalar_lea.vmem %s4, 2
    %v439 = vld [vmem:[%s438] ss:$4 sm:$0x3]
    %v441 = vlaneseq
    %v442 = vshrl.u32 %v441, 7
    %v443 = vsub.s32 0, %v442
    %v444 = vrot.slane %v439, %v443
    %v445 = vlaneseq
    %v446 = vshrl.u32 %v445, 7
    %v447 = vsub.s32 1, %v446
    %v448 = vrot.slane %v439, %v447
    %v483 = vunpack.c.l.b16 %v406
    %v484 = vunpack.c.h.b16 %v406
    %v485 = vunpack.c.l.b16 %v407
    %v486 = vunpack.c.h.b16 %v407
    %v487 = vunpack.c.l.b16 %v408
    %v488 = vunpack.c.h.b16 %v408
    %v489 = vunpack.c.l.b16 %v409
    %v490 = vunpack.c.h.b16 %v409
    %v491 = vunpack.c.l.b16 %v410
    %v492 = vunpack.c.h.b16 %v410
    %v493 = vunpack.c.l.b16 %v411
    %v494 = vunpack.c.h.b16 %v411
    %v495 = vunpack.c.l.b16 %v412
    %v496 = vunpack.c.h.b16 %v412
    %v497 = vunpack.c.l.b16 %v413
    %v498 = vunpack.c.h.b16 %v413
    %v499 = vunpack.c.l.b16 %v414
    %v500 = vunpack.c.h.b16 %v414
    %v501 = vunpack.c.l.b16 %v415
    %v502 = vunpack.c.h.b16 %v415
    %v503 = vunpack.c.l.b16 %v416
    %v504 = vunpack.c.h.b16 %v416
    %v505 = vunpack.c.l.b16 %v417
    %v506 = vunpack.c.h.b16 %v417
    %v507 = vunpack.c.l.b16 %v418
    %v508 = vunpack.c.h.b16 %v418
    %v509 = vunpack.c.l.b16 %v419
    %v510 = vunpack.c.h.b16 %v419
    %v511 = vunpack.c.l.b16 %v420
    %v512 = vunpack.c.h.b16 %v420
    %v513 = vunpack.c.l.b16 %v421
    %v514 = vunpack.c.h.b16 %v421
    %v515 = vunpack.c.l.b16 %v422
    %v516 = vunpack.c.h.b16 %v422
    %v517 = vunpack.c.l.b16 %v423
    %v518 = vunpack.c.h.b16 %v423
    %v519 = vunpack.c.l.b16 %v424
    %v520 = vunpack.c.h.b16 %v424
    %v521 = vunpack.c.l.b16 %v425
    %v522 = vunpack.c.h.b16 %v425
    %v523 = vunpack.c.l.b16 %v426
    %v524 = vunpack.c.h.b16 %v426
    %v525 = vunpack.c.l.b16 %v427
    %v526 = vunpack.c.h.b16 %v427
    %v527 = vunpack.c.l.b16 %v428
    %v528 = vunpack.c.h.b16 %v428
    %v529 = vunpack.c.l.b16 %v429
    %v530 = vunpack.c.h.b16 %v429
    %v531 = vunpack.c.l.b16 %v430
    %v532 = vunpack.c.h.b16 %v430
    %v533 = vunpack.c.l.b16 %v431
    %v534 = vunpack.c.h.b16 %v431
    %v535 = vunpack.c.l.b16 %v432
    %v536 = vunpack.c.h.b16 %v432
    %v537 = vunpack.c.l.b16 %v433
    %v538 = vunpack.c.h.b16 %v433
    %v539 = vunpack.c.l.b16 %v434
    %v540 = vunpack.c.h.b16 %v434
    %v541 = vunpack.c.l.b16 %v435
    %v542 = vunpack.c.h.b16 %v435
    %v543 = vunpack.c.l.b16 %v436
    %v544 = vunpack.c.h.b16 %v436
    %v545 = vunpack.c.l.b16 %v437
    %v546 = vunpack.c.h.b16 %v437
    %v547 = vpack.c.b16 %v485, %v483
    %v548 = vpack.c.b16 %v486, %v484
    %v549 = vpack.c.b16 %v489, %v487
    %v550 = vpack.c.b16 %v490, %v488
    %v551 = vpack.c.b16 %v493, %v491
    %v552 = vpack.c.b16 %v494, %v492
    %v553 = vpack.c.b16 %v497, %v495
    %v554 = vpack.c.b16 %v498, %v496
    %v555 = vpack.c.b16 %v501, %v499
    %v556 = vpack.c.b16 %v502, %v500
    %v557 = vpack.c.b16 %v505, %v503
    %v558 = vpack.c.b16 %v506, %v504
    %v559 = vpack.c.b16 %v509, %v507
    %v560 = vpack.c.b16 %v510, %v508
    %v561 = vpack.c.b16 %v513, %v511
    %v562 = vpack.c.b16 %v514, %v512
    %v563 = vpack.c.b16 %v517, %v515
    %v564 = vpack.c.b16 %v518, %v516
    %v565 = vpack.c.b16 %v521, %v519
    %v566 = vpack.c.b16 %v522, %v520
    %v567 = vpack.c.b16 %v525, %v523
    %v568 = vpack.c.b16 %v526, %v524
    %v569 = vpack.c.b16 %v529, %v527
    %v570 = vpack.c.b16 %v530, %v528
    %v571 = vpack.c.b16 %v533, %v531
    %v572 = vpack.c.b16 %v534, %v532
    %v573 = vpack.c.b16 %v537, %v535
    %v574 = vpack.c.b16 %v538, %v536
    %v575 = vpack.c.b16 %v541, %v539
    %v576 = vpack.c.b16 %v542, %v540
    %v577 = vpack.c.b16 %v545, %v543
    %v578 = vpack.c.b16 %v546, %v544
    %611 = vmatprep.subr.bf16.mxu0 %v548
    %612 = vmatpush1.bf16.msra.mxu0 %v547
    %613 = vmatprep.subr.bf16.mxu0 %v550
    %614 = vmatpush1.bf16.msra.mxu0 %v549
    %615 = vmatprep.subr.bf16.mxu0 %v552
    %616 = vmatpush1.bf16.msra.mxu0 %v551
    %617 = vmatprep.subr.bf16.mxu0 %v554
    %618 = vmatpush1.bf16.msra.mxu0 %v553
    %619 = vmatprep.subr.bf16.mxu0 %v556
    %620 = vmatpush1.bf16.msra.mxu0 %v555
    %621 = vmatprep.subr.bf16.mxu0 %v558
    %622 = vmatpush1.bf16.msra.mxu0 %v557
    %623 = vmatprep.subr.bf16.mxu0 %v560
    %624 = vmatpush1.bf16.msra.mxu0 %v559
    %625 = vmatprep.subr.bf16.mxu0 %v562
    %626 = vmatpush1.bf16.msra.mxu0 %v561
    %627 = vmatprep.subr.bf16.mxu0 %v564
    %628 = vmatpush1.bf16.msra.mxu0 %v563
    %629 = vmatprep.subr.bf16.mxu0 %v566
    %630 = vmatpush1.bf16.msra.mxu0 %v565
    %631 = vmatprep.subr.bf16.mxu0 %v568
    %632 = vmatpush1.bf16.msra.mxu0 %v567
    %633 = vmatprep.subr.bf16.mxu0 %v570
    %634 = vmatpush1.bf16.msra.mxu0 %v569
    %635 = vmatprep.subr.bf16.mxu0 %v572
    %636 = vmatpush1.bf16.msra.mxu0 %v571
    %637 = vmatprep.subr.bf16.mxu0 %v574
    %638 = vmatpush1.bf16.msra.mxu0 %v573
    %639 = vmatprep.subr.bf16.mxu0 %v576
    %640 = vmatpush1.bf16.msra.mxu0 %v575
    %641 = vmatprep.subr.bf16.mxu0 %v578
    %642 = vmatpush1.bf16.msra.mxu0 %v577
    %643 = vmatprep.mubr.bf16.mxu0 %v404
    %644 = vmatmul.mubr.bf16.gmra.mrb[0].mxu0 %v403
    %v645 = vpop.f32.mrb[0].mxu0
    %v646 = vadd.f32 %v444, %v645
    %v647 = vpop.f32.mrb[0].mxu0
    %v648 = vadd.f32 %v448, %v647
    %v649 = vpop.f32.mrb[0].mxu0
    %v650 = vadd.f32 %v444, %v649
    %v651 = vpop.f32.mrb[0].mxu0
    %v652 = vadd.f32 %v448, %v651
    %653 = vdwg.mxu0
    %v654 = vmul.f32 %v646, %v646
    %v655 = vmul.f32 %v648, %v648
    %v656 = vmul.f32 %v650, %v650
    %v657 = vmul.f32 %v652, %v652
    %v658 = vadd.f32 %v654, %v655
    %659 = vadd.xlane.f32.xlu0 %v658
    %v660 = vpop.xlane.xlu0 %659
    %v661 = vadd.f32 %v656, %v657
    %662 = vadd.xlane.f32.xlu0 %v661
    %v663 = vpop.xlane.xlu0 %662
    %v664 = vmul.f32 %v660, %v306
    %v665 = vmul.f32 %v663, %v306
    %v666 = vadd.f32 %v664, 1e-06
    %v667 = vadd.f32 %v665, 1e-06
    %v668 = vrsqrt.pop %v666
    %v669 = vrsqrt.pop %v667
    %v670 = vmul.f32 %v646, %v668
    %v671 = vmul.f32 %v648, %v668
    %v672 = vmul.f32 %v650, %v669
    %v673 = vmul.f32 %v652, %v669
    %s674 = scalar_lea.vmem %s4, 3
    %v675 = vld [vmem:[%s674] ss:$4 sm:$0x3]
    %v677 = vlaneseq
    %v678 = vshrl.u32 %v677, 7
    %v679 = vsub.s32 0, %v678
    %v680 = vrot.slane %v675, %v679
    %v681 = vlaneseq
    %v682 = vshrl.u32 %v681, 7
    %v683 = vsub.s32 1, %v682
    %v684 = vrot.slane %v675, %v683
    %v687 = vmul.f32 %v670, %v680
    %v688 = vmul.f32 %v671, %v684
    %v689 = vmul.f32 %v672, %v680
    %v690 = vmul.f32 %v673, %v684
    %v691 = vmul.f32 %v687, %v687
    %v692 = vmul.f32 %v688, %v688
    %v693 = vmul.f32 %v689, %v689
    %v694 = vmul.f32 %v690, %v690
    %v695 = vmul.f32 %v687, %v691
    %v696 = vmul.f32 %v688, %v692
    %v697 = vmul.f32 %v689, %v693
    %v698 = vmul.f32 %v690, %v694
    %v699 = vmul.f32 %v695, 0.044715
    %v700 = vmul.f32 %v696, 0.044715
    %v701 = vmul.f32 %v697, 0.044715
    %v702 = vmul.f32 %v698, 0.044715
    %v703 = vadd.f32 %v687, %v699
    %v704 = vadd.f32 %v688, %v700
    %v705 = vadd.f32 %v689, %v701
    %v706 = vadd.f32 %v690, %v702
    %v707 = vmul.f32 %v703, 0.7978846
    %v708 = vmul.f32 %v704, 0.7978846
    %v709 = vmul.f32 %v705, 0.7978846
    %v710 = vmul.f32 %v706, 0.7978846
    %v711 = vtanh.pop %v707
    %v712 = vtanh.pop %v708
    %v713 = vtanh.pop %v709
    %v714 = vtanh.pop %v710
    %v715 = vadd.f32 %v711, 1.0
    %v716 = vadd.f32 %v712, 1.0
    %v717 = vadd.f32 %v713, 1.0
    %v718 = vadd.f32 %v714, 1.0
    %v719 = vmul.f32 %v715, 0.5
    %v720 = vmul.f32 %v716, 0.5
    %v721 = vmul.f32 %v717, 0.5
    %v722 = vmul.f32 %v718, 0.5
    %v723 = vmul.f32 %v687, %v719
    %v724 = vmul.f32 %v688, %v720
    %v725 = vmul.f32 %v689, %v721
    %v726 = vmul.f32 %v690, %v722
    %v727 = vrot.slane %v723, 4
    %v728 = vadd.f32 %v723, %v727
    %v729 = vrot.slane %v728, 2
    %v730 = vadd.f32 %v728, %v729
    %v731 = vrot.slane %v730, 1
    %v732 = vadd.f32 %v730, %v731
    %v733 = vrot.slane %v724, 4
    %v734 = vadd.f32 %v724, %v733
    %v735 = vrot.slane %v734, 2
    %v736 = vadd.f32 %v734, %v735
    %v737 = vrot.slane %v736, 1
    %v738 = vadd.f32 %v736, %v737
    %v739 = vrot.slane %v725, 4
    %v740 = vadd.f32 %v725, %v739
    %v741 = vrot.slane %v740, 2
    %v742 = vadd.f32 %v740, %v741
    %v743 = vrot.slane %v742, 1
    %v744 = vadd.f32 %v742, %v743
    %v745 = vrot.slane %v726, 4
    %v746 = vadd.f32 %v726, %v745
    %v747 = vrot.slane %v746, 2
    %v748 = vadd.f32 %v746, %v747
    %v749 = vrot.slane %v748, 1
    %v750 = vadd.f32 %v748, %v749
    %v751 = vmul.f32 %v732, %v394
    %v752 = vmul.f32 %v738, %v394
    %v753 = vmul.f32 %v744, %v394
    %v754 = vmul.f32 %v750, %v394
    %v755 = vadd.f32 %v395, %v751
    %v756 = vadd.f32 %v396, %v752
    %v757 = vadd.f32 %v397, %v753
    %v758 = vadd.f32 %v398, %v754
    %v759 = vpack.c.bf16 %v755, %v755
    %v760 = vpack.c.bf16 %v756, %v756
    %v761 = vpack.c.bf16 %v757, %v757
    %v762 = vpack.c.bf16 %v758, %v758
    %v763 = vld [vmem:[%s5] sm:$0xf]
    %v764 = vld [vmem:[%s5 + $0x4] sm:$0xf]
    %v765 = vld [vmem:[%s5 + $0x8] sm:$0xf]
    %v766 = vld [vmem:[%s5 + $0xc] sm:$0xf]
    %v767 = vld [vmem:[%s5 + $0x10] sm:$0xf]
    %v768 = vld [vmem:[%s5 + $0x14] sm:$0xf]
    %v769 = vld [vmem:[%s5 + $0x18] sm:$0xf]
    %v770 = vld [vmem:[%s5 + $0x1c] sm:$0xf]
    %v771 = vld [vmem:[%s5 + $0x20] sm:$0xf]
    %v772 = vld [vmem:[%s5 + $0x24] sm:$0xf]
    %v773 = vld [vmem:[%s5 + $0x28] sm:$0xf]
    %v774 = vld [vmem:[%s5 + $0x2c] sm:$0xf]
    %v775 = vld [vmem:[%s5 + $0x30] sm:$0xf]
    %v776 = vld [vmem:[%s5 + $0x34] sm:$0xf]
    %v777 = vld [vmem:[%s5 + $0x38] sm:$0xf]
    %v778 = vld [vmem:[%s5 + $0x3c] sm:$0xf]
    %v779 = vld [vmem:[%s5 + $0x40] sm:$0xf]
    %v780 = vld [vmem:[%s5 + $0x44] sm:$0xf]
    %v781 = vld [vmem:[%s5 + $0x48] sm:$0xf]
    %v782 = vld [vmem:[%s5 + $0x4c] sm:$0xf]
    %v783 = vld [vmem:[%s5 + $0x50] sm:$0xf]
    %v784 = vld [vmem:[%s5 + $0x54] sm:$0xf]
    %v785 = vld [vmem:[%s5 + $0x58] sm:$0xf]
    %v786 = vld [vmem:[%s5 + $0x5c] sm:$0xf]
    %v787 = vld [vmem:[%s5 + $0x60] sm:$0xf]
    %v788 = vld [vmem:[%s5 + $0x64] sm:$0xf]
    %v789 = vld [vmem:[%s5 + $0x68] sm:$0xf]
    %v790 = vld [vmem:[%s5 + $0x6c] sm:$0xf]
    %v791 = vld [vmem:[%s5 + $0x70] sm:$0xf]
    %v792 = vld [vmem:[%s5 + $0x74] sm:$0xf]
    %v793 = vld [vmem:[%s5 + $0x78] sm:$0xf]
    %v794 = vld [vmem:[%s5 + $0x7c] sm:$0xf]
    %v795 = vld [vmem:[%s6] sm:$0x1]
    %v797 = vlaneseq
    %v798 = vshrl.u32 %v797, 7
    %v799 = vsub.s32 0, %v798
    %v800 = vrot.slane %v795, %v799
    %v806 = vunpack.c.l.b16 %v759
    %v807 = vunpack.c.l.b16 %v760
    %v808 = vunpack.c.l.b16 %v761
    %v809 = vunpack.c.l.b16 %v762
    %vm810 = vcmask 1041409
    %v811 = vsel %vm810, %v808, %v806
    %v812 = vsel %vm810, %v809, %v807
    %v813 = vpack.c.b16 %v811, %v811
    %v814 = vpack.c.b16 %v812, %v812
    %v849 = vunpack.c.l.b16 %v763
    %v850 = vunpack.c.l.b16 %v764
    %v851 = vunpack.c.l.b16 %v765
    %v852 = vunpack.c.l.b16 %v766
    %v853 = vunpack.c.l.b16 %v767
    %v854 = vunpack.c.l.b16 %v768
    %v855 = vunpack.c.l.b16 %v769
    %v856 = vunpack.c.l.b16 %v770
    %v857 = vunpack.c.l.b16 %v771
    %v858 = vunpack.c.l.b16 %v772
    %v859 = vunpack.c.l.b16 %v773
    %v860 = vunpack.c.l.b16 %v774
    %v861 = vunpack.c.l.b16 %v775
    %v862 = vunpack.c.l.b16 %v776
    %v863 = vunpack.c.l.b16 %v777
    %v864 = vunpack.c.l.b16 %v778
    %v865 = vunpack.c.l.b16 %v779
    %v866 = vunpack.c.l.b16 %v780
    %v867 = vunpack.c.l.b16 %v781
    %v868 = vunpack.c.l.b16 %v782
    %v869 = vunpack.c.l.b16 %v783
    %v870 = vunpack.c.l.b16 %v784
    %v871 = vunpack.c.l.b16 %v785
    %v872 = vunpack.c.l.b16 %v786
    %v873 = vunpack.c.l.b16 %v787
    %v874 = vunpack.c.l.b16 %v788
    %v875 = vunpack.c.l.b16 %v789
    %v876 = vunpack.c.l.b16 %v790
    %v877 = vunpack.c.l.b16 %v791
    %v878 = vunpack.c.l.b16 %v792
    %v879 = vunpack.c.l.b16 %v793
    %v880 = vunpack.c.l.b16 %v794
    %v881 = vpack.c.b16 %v850, %v849
    %v882 = vpack.c.b16 %v852, %v851
    %v883 = vpack.c.b16 %v854, %v853
    %v884 = vpack.c.b16 %v856, %v855
    %v885 = vpack.c.b16 %v858, %v857
    %v886 = vpack.c.b16 %v860, %v859
    %v887 = vpack.c.b16 %v862, %v861
    %v888 = vpack.c.b16 %v864, %v863
    %v889 = vpack.c.b16 %v866, %v865
    %v890 = vpack.c.b16 %v868, %v867
    %v891 = vpack.c.b16 %v870, %v869
    %v892 = vpack.c.b16 %v872, %v871
    %v893 = vpack.c.b16 %v874, %v873
    %v894 = vpack.c.b16 %v876, %v875
    %v895 = vpack.c.b16 %v878, %v877
    %v896 = vpack.c.b16 %v880, %v879
    %913 = vmatprep.subr.bf16.mxu0 0
    %914 = vmatpush1.bf16.msra.mxu0 %v881
    %915 = vmatprep.subr.bf16.mxu0 0
    %916 = vmatpush1.bf16.msra.mxu0 %v882
    %917 = vmatprep.subr.bf16.mxu0 0
    %918 = vmatpush1.bf16.msra.mxu0 %v883
    %919 = vmatprep.subr.bf16.mxu0 0
    %920 = vmatpush1.bf16.msra.mxu0 %v884
    %921 = vmatprep.subr.bf16.mxu0 0
    %922 = vmatpush1.bf16.msra.mxu0 %v885
    %923 = vmatprep.subr.bf16.mxu0 0
    %924 = vmatpush1.bf16.msra.mxu0 %v886
    %925 = vmatprep.subr.bf16.mxu0 0
    %926 = vmatpush1.bf16.msra.mxu0 %v887
    %927 = vmatprep.subr.bf16.mxu0 0
    %928 = vmatpush1.bf16.msra.mxu0 %v888
    %929 = vmatprep.subr.bf16.mxu0 0
    %930 = vmatpush1.bf16.msra.mxu0 %v889
    %931 = vmatprep.subr.bf16.mxu0 0
    %932 = vmatpush1.bf16.msra.mxu0 %v890
    %933 = vmatprep.subr.bf16.mxu0 0
    %934 = vmatpush1.bf16.msra.mxu0 %v891
    %935 = vmatprep.subr.bf16.mxu0 0
    %936 = vmatpush1.bf16.msra.mxu0 %v892
    %937 = vmatprep.subr.bf16.mxu0 0
    %938 = vmatpush1.bf16.msra.mxu0 %v893
    %939 = vmatprep.subr.bf16.mxu0 0
    %940 = vmatpush1.bf16.msra.mxu0 %v894
    %941 = vmatprep.subr.bf16.mxu0 0
    %942 = vmatpush1.bf16.msra.mxu0 %v895
    %943 = vmatprep.subr.bf16.mxu0 0
    %944 = vmatpush1.bf16.msra.mxu0 %v896
    %945 = vmatprep.mubr.bf16.mxu0 %v814
    %946 = vmatmul.mubr.bf16.gmra.mrb[0].mxu0 %v813
    %v947 = vpop.f32.mrb[0].mxu0
    %v948 = vadd.f32 %v800, %v947
    %v949 = vpop.f32.mrb[0].mxu0
    %v950 = vpop.f32.mrb[0].mxu0
    %v951 = vpop.f32.mrb[0].mxu0
    %952 = vdwg.mxu0
    %s953 = sld [smem:[#allocation2]]
    %v954 = vstv %s953
    %v955 = vmul.f32 %v948, %v954
    %vm956 = vcmask 25600
    %v957 = vsel %vm956, %v955, -inf
    %958 = vmax.xlane.f32.xlu0 %v957
    %v959 = vpop.xlane.xlu0 %958
    %v960 = vsub.f32 %v955, %v959
    %v961 = vmul.f32 %v960, 1.442695
    %v962 = vpow.pop %v961
    %v963 = vsel %vm956, %v962, 0.0
    %964 = vadd.xlane.f32.xlu0 %v963
    %v965 = vpop.xlane.xlu0 %964
    %v966 = vrcp.pop %v965
    %v967 = vmul.f32 %v962, %v966
    %968 = vst.msk [vmem:[#allocation6] sm:$0x3] %vm956, %v967
    // Predicated region
    $region34: #{tpu_custom_call.1} parent=1 // pred_check
      _
    $region35: #{tpu_custom_call.1} parent=1 // pred_check_branch
      %970 = sbr.rel (0) target = $region37
    $region36: #{tpu_custom_call.1} parent=1 // pred_region
      %s972 = ssub.s32 32, 32
      %973 = vsyncadd [#allocation5], %s972
      %s975 = sshll.u32 [#allocation6], 4
      %s976 = int_to_ptr.vmem [resolvable:$true] %s975
      %978 = dma.vmem_to_hbm [thread:$0]  %s976, 32, %s7, [#allocation5]
    $region37: #{tpu_custom_call.1} parent=1 // pred_fallthru
      _
    // Predicated region
    $region38: #{tpu_custom_call.1} parent=1 // pred_check
      _
    $region39: #{tpu_custom_call.1} parent=1 // pred_check_branch
      %980 = sbr.rel (0) target = $region41
    $region40: #{tpu_custom_call.1} parent=1 // pred_region
      %981 = dma.done [#allocation5], 32
    $region41: #{tpu_custom_call.1} parent=1 // pred_fallthru
      _
    %982 = vsyncpa [#allocation4], 1
    %983 = vsyncpa [#allocation5], 1

</llo_original>
